<compile_context>
chip_gen: v5e
topology: v5e:2x2
jax: 0.10.0
libtpu: 0.0.40
codegen_flags: <defaults>
</compile_context>

<pallas_src>
import math
from functools import partial

import numpy as np
import jax
import jax.numpy as jnp
from jax import lax
from jax.experimental import pallas as pl
from jax.experimental.pallas import tpu as pltpu


# ----------------------------------------------------------------- kernel ---

def _fused_mha_kernel(x_ref, xk_ref, adj_ref,
                      wq_ref, bq_ref, wqa_ref, bqa_ref,
                      wk_ref, bk_ref, we_ref, be_ref,
                      wf_ref, bf_ref, cls_ref, gamma_ref, beta_ref,
                      o_ref, *, num_view, num_nodes, inv_scale, eps):
    V = num_view
    N = num_nodes
    f32 = jnp.float32

    x = x_ref[...]                                       # (V*N, D) natural view stack

    # ---- mean over views (rows v*N + n of the natural stack) ----
    mean = x[0:N, :]
    for v in range(1, V):
        mean = mean + x[v * N:(v + 1) * N, :]
    mean = mean * (1.0 / V)

    # ---- residual = Q in natural node/feature layout ----
    q_res = jnp.dot(mean, wq_ref[...], preferred_element_type=f32) + bq_ref[...]

    # ---- K and V (graph encoder) in the torch flat-view ("attention") row layout
    #      row r = e*N + blk*NB + a ; lane c carries the (w, d) class via c mod V*dph.
    kk = jnp.dot(xk_ref[...], wk_ref[...], preferred_element_type=f32) + bk_ref[...]
    ah = jnp.dot(adj_ref[...], x, preferred_element_type=f32)     # block-diag adjacency
    vv = jnp.dot(ah, we_ref[...], preferred_element_type=f32) + be_ref[...]

    # ---- scores per e-group; Q uses per-e column-duplicated weights (no relayout) ----
    s_list = []
    for e in range(V):
        qq = jnp.dot(mean, wqa_ref[e], preferred_element_type=f32) + bqa_ref[e]
        s_list.append(qq * kk[e * N:(e + 1) * N, :] * inv_scale)

    # ---- softmax over torch dim=0 (N*H): reduce over all rows of every e-group and
    #      over lane-congruence classes (mod V*dph) via the constant 0/1 matrix `cls`.
    colmax = jnp.max(s_list[0], axis=0, keepdims=True)
    for s in s_list[1:]:
        colmax = jnp.maximum(colmax, jnp.max(s, axis=0, keepdims=True))
    gmax = jnp.max(colmax, axis=-1, keepdims=True)               # (1, 1) constant shift

    p_list = [jnp.exp(s - gmax) for s in s_list]
    colsum = p_list[0].sum(axis=0, keepdims=True)
    for p in p_list[1:]:
        colsum = colsum + p.sum(axis=0, keepdims=True)
    denom = jnp.dot(colsum, cls_ref[...], preferred_element_type=f32)   # (1, D)
    inv_denom = pl.reciprocal(denom, approx=False)               # exact

    # ---- context (summed over torch dim=1 == e-groups), final linear, residual, LN ---
    ctx = p_list[0] * vv[0:N, :]
    for e in range(1, V):
        ctx = ctx + p_list[e] * vv[e * N:(e + 1) * N, :]
    ctx = ctx * inv_denom

    out = jnp.dot(ctx, wf_ref[...], preferred_element_type=f32) + bf_ref[...]
    y = q_res + out
    mu = jnp.mean(y, axis=-1, keepdims=True)
    var = jnp.mean(jnp.square(y - mu), axis=-1, keepdims=True)
    o_ref[...] = (y - mu) * lax.rsqrt(var + eps) * gamma_ref[...] + beta_ref[...]


# ---------------------------------------------------------------- wrapper ---

def multi_head_attention(gcns_list, adj, params, num_heads):
    f32 = jnp.float32
    V = len(gcns_list)
    N, D = gcns_list[0].shape
    H = num_heads
    dph = D // H
    # TODO(synk): the relayout-free formulation needs num_heads % num_view == 0
    # and N % num_view == 0 (true for this module's configs); general shapes
    # would need an in-kernel gather/relayout fallback.
    assert D % H == 0 and H % V == 0 and N % V == 0
    NB = N // V                 # rows per block
    HB = H // V
    P = V * dph                 # softmax lane-class period

    x_nat = jnp.stack([g.astype(f32) for g in gcns_list], axis=0)       # (V, N, D)
    x_flat = x_nat.reshape(V * N, D)
    # K input in attention row layout: xk_att[e*N + blk*NB + a] = x_nat[blk, a*V + e]
    xk_att = jnp.transpose(x_nat.reshape(V, NB, V, D), (2, 0, 1, 3)).reshape(V * N, D)
    # Block-diagonal adjacency in the same row layout:
    #   adj_att[e*N + blk*NB + a, blk*N + m] = adj[blk, a*V + e, m]
    adjf = adj.astype(f32)
    adj_perm = jnp.transpose(adjf.reshape(V, NB, V, N), (2, 0, 1, 3))    # (e,blk,a,m)
    adj_att = jnp.einsum('ebam,bc->ebacm', adj_perm,
                         jnp.eye(V, dtype=f32)).reshape(V * N, V * N)

    # torch Linear weights are (Dout, Din) — pre-transpose once.
    wqT = params["Wq"].astype(f32).T
    wkT = params["Wk"].astype(f32).T
    weT = params["We"].astype(f32).T
    wfT = params["Wf"].astype(f32).T
    bq = params["bq"].astype(f32)
    bq2 = bq.reshape(1, D)
    bk = params["bk"].astype(f32).reshape(1, D)
    be = params["be"].astype(f32).reshape(1, D)
    bf = params["bf"].astype(f32).reshape(1, D)
    gamma = params["gamma"].astype(f32).reshape(1, D)
    beta = params["beta"].astype(f32).reshape(1, D)

    # Column-permuted/duplicated Q weight so the kernel never relayouts Q:
    #   wq_all[e][:, c] = WqT[:, g_e(c)],  g_e(c) = (e*(H//V) + c//P)*dph + c%dph
    c = np.arange(D)
    g = ((np.arange(V)[:, None] * HB + c[None, :] // P) * dph
         + (c[None, :] % dph))                                           # (V, D)
    wq_all = jnp.stack([wqT[:, g[e]] for e in range(V)], axis=0)         # (V, D, D)
    bq_all = jnp.stack([bq[g[e]].reshape(1, D) for e in range(V)], axis=0)  # (V,1,D)

    # 0/1 matrix summing lane-congruence classes (softmax denominator over torch dim 0).
    cls = jnp.asarray((c[:, None] % P) == (c[None, :] % P), dtype=f32)   # (D, D)

    inv_scale = 1.0 / math.sqrt(dph)

    kernel = partial(_fused_mha_kernel, num_view=V, num_nodes=N,
                     inv_scale=inv_scale, eps=1e-5)

    flops = 2 * ((V * N) * (V * N) * D        # block-diagonal graph-encoder matmul
                 + 2 * (V * N) * D * D        # K linear + We linear
                 + (V + 2) * N * D * D        # Q residual + per-e Q + final linear
                 + D * D)                     # class-fold matmul
    args = (x_flat, xk_att, adj_att, wqT, bq2, wq_all, bq_all,
            wkT, bk, weT, be, wfT, bf, cls, gamma, beta)
    bytes_accessed = 4 * (sum(int(np.prod(a.shape)) for a in args) + N * D)

    out = pl.pallas_call(
        kernel,
        out_shape=jax.ShapeDtypeStruct((N, D), f32),
        grid=(1,),
        in_specs=[
            pl.BlockSpec((V * N, D), lambda i: (0, 0)),         # x_flat
            pl.BlockSpec((V * N, D), lambda i: (0, 0)),         # xk_att
            pl.BlockSpec((V * N, V * N), lambda i: (0, 0)),     # adj_att (block-diag)
            pl.BlockSpec((D, D), lambda i: (0, 0)),             # WqT
            pl.BlockSpec((1, D), lambda i: (0, 0)),             # bq
            pl.BlockSpec((V, D, D), lambda i: (0, 0, 0)),       # Wq_all
            pl.BlockSpec((V, 1, D), lambda i: (0, 0, 0)),       # bq_all
            pl.BlockSpec((D, D), lambda i: (0, 0)),             # WkT
            pl.BlockSpec((1, D), lambda i: (0, 0)),             # bk
            pl.BlockSpec((D, D), lambda i: (0, 0)),             # WeT
            pl.BlockSpec((1, D), lambda i: (0, 0)),             # be
            pl.BlockSpec((D, D), lambda i: (0, 0)),             # WfT
            pl.BlockSpec((1, D), lambda i: (0, 0)),             # bf
            pl.BlockSpec((D, D), lambda i: (0, 0)),             # cls
            pl.BlockSpec((1, D), lambda i: (0, 0)),             # gamma
            pl.BlockSpec((1, D), lambda i: (0, 0)),             # beta
        ],
        out_specs=pl.BlockSpec((N, D), lambda i: (0, 0)),
        compiler_params=pltpu.CompilerParams(
            dimension_semantics=("arbitrary",)),
        cost_estimate=pl.CostEstimate(
            flops=int(flops), transcendentals=int(V * N * D),
            bytes_accessed=int(bytes_accessed)),
    )(*args)

    return out


# --------------------------------------------------------- pure-JAX check ---

def reference(gcns_list, adj, params, num_heads):
    V = len(gcns_list)
    N, D = gcns_list[0].shape
    H = num_heads
    dph = D // H
    stack = jnp.stack(gcns_list, 0)
    Q = jnp.mean(stack, 0) @ params["Wq"].T + params["bq"]
    K = stack @ params["Wk"].T + params["bk"]
    AH = jnp.stack([adj[i] @ gcns_list[i] for i in range(V)], 0)
    Vv = AH @ params["We"].T + params["be"]
    residual = Q
    k_r = K.reshape(N * H, V, dph)
    v_r = Vv.reshape(N * H, V, dph)
    q_r = Q.reshape(N * H, 1, dph)
    scale = math.sqrt(dph)
    attn = jax.nn.softmax((q_r * k_r) / scale, axis=0)
    context = (attn * v_r).reshape(N, V, D).sum(axis=1)
    out = context @ params["Wf"].T + params["bf"]
    y = residual + out
    mu = y.mean(-1, keepdims=True)
    var = ((y - mu) ** 2).mean(-1, keepdims=True)
    return (y - mu) / jnp.sqrt(var + 1e-5) * params["gamma"] + params["beta"]


# ------------------------------------------------------------------- main ---

if __name__ == "__main__":
    model_dim, num_heads = 32, 8     # dim_per_head = 4
    num_view, N = 2, 8

    key = jax.random.PRNGKey(0)
    ks = jax.random.split(key, 12)
    params = {
        "Wq":    jax.random.normal(ks[0], (model_dim, model_dim), jnp.float32) * 0.1,
        "bq":    jax.random.normal(ks[1], (model_dim,), jnp.float32) * 0.01,
        "Wk":    jax.random.normal(ks[2], (model_dim, model_dim), jnp.float32) * 0.1,
        "bk":    jax.random.normal(ks[3], (model_dim,), jnp.float32) * 0.01,
        "We":    jax.random.normal(ks[4], (model_dim, model_dim), jnp.float32) * 0.1,
        "be":    jax.random.normal(ks[5], (model_dim,), jnp.float32) * 0.01,
        "Wf":    jax.random.normal(ks[6], (model_dim, model_dim), jnp.float32) * 0.1,
        "bf":    jax.random.normal(ks[7], (model_dim,), jnp.float32) * 0.01,
        "gamma": jnp.ones((model_dim,), jnp.float32),
        "beta":  jnp.zeros((model_dim,), jnp.float32),
    }
    gcns_output = [jax.random.normal(ks[8 + i], (N, model_dim), jnp.float32)
                   for i in range(num_view)]
    adj = jax.random.uniform(ks[10], (num_view, N, N), jnp.float32)

    fwd = jax.jit(partial(multi_head_attention, num_heads=num_heads))
    out = jax.block_until_ready(fwd(gcns_output, adj, params))

    ref = reference(gcns_output, adj, params, num_heads)
    assert out.shape == (N, model_dim)
    assert jnp.allclose(out, ref, atol=1e-4, rtol=1e-4), "mismatch vs reference"
    print("KERNEL_OK")
</pallas_src>

<mosaic_0001>
module attributes {stable_mosaic.version = 11 : i64} {
  func.func @_fused_mha_kernel(%arg0: i32, %arg1: memref<16x32xf32, #tpu.memory_space<vmem>>, %arg2: memref<16x32xf32, #tpu.memory_space<vmem>>, %arg3: memref<16x16xf32, #tpu.memory_space<vmem>>, %arg4: memref<32x32xf32, #tpu.memory_space<vmem>>, %arg5: memref<1x32xf32, #tpu.memory_space<vmem>>, %arg6: memref<2x32x32xf32, #tpu.memory_space<vmem>>, %arg7: memref<2x1x32xf32, #tpu.memory_space<vmem>>, %arg8: memref<32x32xf32, #tpu.memory_space<vmem>>, %arg9: memref<1x32xf32, #tpu.memory_space<vmem>>, %arg10: memref<32x32xf32, #tpu.memory_space<vmem>>, %arg11: memref<1x32xf32, #tpu.memory_space<vmem>>, %arg12: memref<32x32xf32, #tpu.memory_space<vmem>>, %arg13: memref<1x32xf32, #tpu.memory_space<vmem>>, %arg14: memref<32x32xf32, #tpu.memory_space<vmem>>, %arg15: memref<1x32xf32, #tpu.memory_space<vmem>>, %arg16: memref<1x32xf32, #tpu.memory_space<vmem>>, %arg17: memref<8x32xf32, #tpu.memory_space<vmem>>) attributes {dimension_semantics = [#tpu.dimension_semantics<arbitrary>], iteration_bounds = array<i64: 1>, scalar_prefetch = 0 : i64, scratch_operands = 0 : i64, tpu.core_type = #tpu.core_type<tc>, window_params = [{pipeline_mode = #tpu.pipeline_mode<synchronous>, transform_indices = @transform_0, window_bounds = array<i64: 16, 32>}, {pipeline_mode = #tpu.pipeline_mode<synchronous>, transform_indices = @transform_1, window_bounds = array<i64: 16, 32>}, {pipeline_mode = #tpu.pipeline_mode<synchronous>, transform_indices = @transform_2, window_bounds = array<i64: 16, 16>}, {pipeline_mode = #tpu.pipeline_mode<synchronous>, transform_indices = @transform_3, window_bounds = array<i64: 32, 32>}, {pipeline_mode = #tpu.pipeline_mode<synchronous>, transform_indices = @transform_4, window_bounds = array<i64: 1, 32>}, {pipeline_mode = #tpu.pipeline_mode<synchronous>, transform_indices = @transform_5, window_bounds = array<i64: 2, 32, 32>}, {pipeline_mode = #tpu.pipeline_mode<synchronous>, transform_indices = @transform_6, window_bounds = array<i64: 2, 1, 32>}, {pipeline_mode = #tpu.pipeline_mode<synchronous>, transform_indices = @transform_7, window_bounds = array<i64: 32, 32>}, {pipeline_mode = #tpu.pipeline_mode<synchronous>, transform_indices = @transform_8, window_bounds = array<i64: 1, 32>}, {pipeline_mode = #tpu.pipeline_mode<synchronous>, transform_indices = @transform_9, window_bounds = array<i64: 32, 32>}, {pipeline_mode = #tpu.pipeline_mode<synchronous>, transform_indices = @transform_10, window_bounds = array<i64: 1, 32>}, {pipeline_mode = #tpu.pipeline_mode<synchronous>, transform_indices = @transform_11, window_bounds = array<i64: 32, 32>}, {pipeline_mode = #tpu.pipeline_mode<synchronous>, transform_indices = @transform_12, window_bounds = array<i64: 1, 32>}, {pipeline_mode = #tpu.pipeline_mode<synchronous>, transform_indices = @transform_13, window_bounds = array<i64: 32, 32>}, {pipeline_mode = #tpu.pipeline_mode<synchronous>, transform_indices = @transform_14, window_bounds = array<i64: 1, 32>}, {pipeline_mode = #tpu.pipeline_mode<synchronous>, transform_indices = @transform_15, window_bounds = array<i64: 1, 32>}, {pipeline_mode = #tpu.pipeline_mode<synchronous>, transform_indices = @transform_16, window_bounds = array<i64: 8, 32>}]} {
    %c0 = arith.constant 0 : index
    %c0_0 = arith.constant 0 : index
    %0 = vector.load %arg1[%c0, %c0_0] : memref<16x32xf32, #tpu.memory_space<vmem>>, vector<16x32xf32>
    %1 = vector.extract_strided_slice %0 {offsets = [0, 0], sizes = [8, 32], strides = [1, 1]} : vector<16x32xf32> to vector<8x32xf32>
    %2 = vector.extract_strided_slice %0 {offsets = [8, 0], sizes = [8, 32], strides = [1, 1]} : vector<16x32xf32> to vector<8x32xf32>
    %3 = arith.addf %1, %2 : vector<8x32xf32>
    %cst = arith.constant 5.000000e-01 : f32
    %4 = vector.broadcast %cst : f32 to vector<8x32xf32>
    %5 = arith.mulf %3, %4 : vector<8x32xf32>
    %c0_1 = arith.constant 0 : index
    %c0_2 = arith.constant 0 : index
    %6 = vector.load %arg4[%c0_1, %c0_2] : memref<32x32xf32, #tpu.memory_space<vmem>>, vector<32x32xf32>
    %cst_3 = arith.constant dense<0.000000e+00> : vector<8x32xf32>
    %7 = tpu.matmul %5, %6, %cst_3 {dimension_numbers = #tpu.dot_dimension_numbers<[1], [0], [0], [1], [0, 0, 1, 1], [], []>} : vector<8x32xf32>, vector<32x32xf32>, vector<8x32xf32> -> vector<8x32xf32>
    %c0_4 = arith.constant 0 : index
    %c0_5 = arith.constant 0 : index
    %8 = vector.load %arg5[%c0_4, %c0_5] : memref<1x32xf32, #tpu.memory_space<vmem>>, vector<1x32xf32>
    %9 = vector.broadcast %8 : vector<1x32xf32> to vector<8x32xf32>
    %10 = arith.addf %7, %9 : vector<8x32xf32>
    %c0_6 = arith.constant 0 : index
    %c0_7 = arith.constant 0 : index
    %11 = vector.load %arg2[%c0_6, %c0_7] : memref<16x32xf32, #tpu.memory_space<vmem>>, vector<16x32xf32>
    %c0_8 = arith.constant 0 : index
    %c0_9 = arith.constant 0 : index
    %12 = vector.load %arg8[%c0_8, %c0_9] : memref<32x32xf32, #tpu.memory_space<vmem>>, vector<32x32xf32>
    %cst_10 = arith.constant dense<0.000000e+00> : vector<16x32xf32>
    %13 = tpu.matmul %11, %12, %cst_10 {dimension_numbers = #tpu.dot_dimension_numbers<[1], [0], [0], [1], [0, 0, 1, 1], [], []>} : vector<16x32xf32>, vector<32x32xf32>, vector<16x32xf32> -> vector<16x32xf32>
    %c0_11 = arith.constant 0 : index
    %c0_12 = arith.constant 0 : index
    %14 = vector.load %arg9[%c0_11, %c0_12] : memref<1x32xf32, #tpu.memory_space<vmem>>, vector<1x32xf32>
    %15 = vector.broadcast %14 : vector<1x32xf32> to vector<16x32xf32>
    %16 = arith.addf %13, %15 : vector<16x32xf32>
    %c0_13 = arith.constant 0 : index
    %c0_14 = arith.constant 0 : index
    %17 = vector.load %arg3[%c0_13, %c0_14] : memref<16x16xf32, #tpu.memory_space<vmem>>, vector<16x16xf32>
    %cst_15 = arith.constant dense<0.000000e+00> : vector<16x32xf32>
    %18 = tpu.matmul %17, %0, %cst_15 {dimension_numbers = #tpu.dot_dimension_numbers<[1], [0], [0], [1], [0, 0, 1, 1], [], []>} : vector<16x16xf32>, vector<16x32xf32>, vector<16x32xf32> -> vector<16x32xf32>
    %c0_16 = arith.constant 0 : index
    %c0_17 = arith.constant 0 : index
    %19 = vector.load %arg10[%c0_16, %c0_17] : memref<32x32xf32, #tpu.memory_space<vmem>>, vector<32x32xf32>
    %cst_18 = arith.constant dense<0.000000e+00> : vector<16x32xf32>
    %20 = tpu.matmul %18, %19, %cst_18 {dimension_numbers = #tpu.dot_dimension_numbers<[1], [0], [0], [1], [0, 0, 1, 1], [], []>} : vector<16x32xf32>, vector<32x32xf32>, vector<16x32xf32> -> vector<16x32xf32>
    %c0_19 = arith.constant 0 : index
    %c0_20 = arith.constant 0 : index
    %21 = vector.load %arg11[%c0_19, %c0_20] : memref<1x32xf32, #tpu.memory_space<vmem>>, vector<1x32xf32>
    %22 = vector.broadcast %21 : vector<1x32xf32> to vector<16x32xf32>
    %23 = arith.addf %20, %22 : vector<16x32xf32>
    %c0_21 = arith.constant 0 : index
    %c0_22 = arith.constant 0 : index
    %c0_23 = arith.constant 0 : index
    %24 = vector.load %arg6[%c0_21, %c0_22, %c0_23] : memref<2x32x32xf32, #tpu.memory_space<vmem>>, vector<1x32x32xf32>
    %25 = vector.shape_cast %24 : vector<1x32x32xf32> to vector<32x32xf32>
    %cst_24 = arith.constant dense<0.000000e+00> : vector<8x32xf32>
    %26 = tpu.matmul %5, %25, %cst_24 {dimension_numbers = #tpu.dot_dimension_numbers<[1], [0], [0], [1], [0, 0, 1, 1], [], []>} : vector<8x32xf32>, vector<32x32xf32>, vector<8x32xf32> -> vector<8x32xf32>
    %c0_25 = arith.constant 0 : index
    %c0_26 = arith.constant 0 : index
    %c0_27 = arith.constant 0 : index
    %27 = vector.load %arg7[%c0_25, %c0_26, %c0_27] : memref<2x1x32xf32, #tpu.memory_space<vmem>>, vector<1x1x32xf32>
    %28 = vector.shape_cast %27 : vector<1x1x32xf32> to vector<1x32xf32>
    %29 = vector.broadcast %28 : vector<1x32xf32> to vector<8x32xf32>
    %30 = arith.addf %26, %29 : vector<8x32xf32>
    %31 = vector.extract_strided_slice %16 {offsets = [0, 0], sizes = [8, 32], strides = [1, 1]} : vector<16x32xf32> to vector<8x32xf32>
    %32 = arith.mulf %30, %31 : vector<8x32xf32>
    %cst_28 = arith.constant 5.000000e-01 : f32
    %33 = vector.broadcast %cst_28 : f32 to vector<8x32xf32>
    %34 = arith.mulf %32, %33 : vector<8x32xf32>
    %c1 = arith.constant 1 : index
    %c0_29 = arith.constant 0 : index
    %c0_30 = arith.constant 0 : index
    %35 = vector.load %arg6[%c1, %c0_29, %c0_30] : memref<2x32x32xf32, #tpu.memory_space<vmem>>, vector<1x32x32xf32>
    %36 = vector.shape_cast %35 : vector<1x32x32xf32> to vector<32x32xf32>
    %cst_31 = arith.constant dense<0.000000e+00> : vector<8x32xf32>
    %37 = tpu.matmul %5, %36, %cst_31 {dimension_numbers = #tpu.dot_dimension_numbers<[1], [0], [0], [1], [0, 0, 1, 1], [], []>} : vector<8x32xf32>, vector<32x32xf32>, vector<8x32xf32> -> vector<8x32xf32>
    %c1_32 = arith.constant 1 : index
    %c0_33 = arith.constant 0 : index
    %c0_34 = arith.constant 0 : index
    %38 = vector.load %arg7[%c1_32, %c0_33, %c0_34] : memref<2x1x32xf32, #tpu.memory_space<vmem>>, vector<1x1x32xf32>
    %39 = vector.shape_cast %38 : vector<1x1x32xf32> to vector<1x32xf32>
    %40 = vector.broadcast %39 : vector<1x32xf32> to vector<8x32xf32>
    %41 = arith.addf %37, %40 : vector<8x32xf32>
    %42 = vector.extract_strided_slice %16 {offsets = [8, 0], sizes = [8, 32], strides = [1, 1]} : vector<16x32xf32> to vector<8x32xf32>
    %43 = arith.mulf %41, %42 : vector<8x32xf32>
    %cst_35 = arith.constant 5.000000e-01 : f32
    %44 = vector.broadcast %cst_35 : f32 to vector<8x32xf32>
    %45 = arith.mulf %43, %44 : vector<8x32xf32>
    %cst_36 = arith.constant dense<0xFF800000> : vector<32xf32>
    %46 = vector.multi_reduction <maximumf>, %34, %cst_36 [0] : vector<8x32xf32> to vector<32xf32>
    %47 = vector.shape_cast %46 : vector<32xf32> to vector<1x32xf32>
    %cst_37 = arith.constant dense<0xFF800000> : vector<32xf32>
    %48 = vector.multi_reduction <maximumf>, %45, %cst_37 [0] : vector<8x32xf32> to vector<32xf32>
    %49 = vector.shape_cast %48 : vector<32xf32> to vector<1x32xf32>
    %50 = arith.maximumf %47, %49 : vector<1x32xf32>
    %cst_38 = arith.constant dense<0xFF800000> : vector<1xf32>
    %51 = vector.multi_reduction <maximumf>, %50, %cst_38 [1] : vector<1x32xf32> to vector<1xf32>
    %52 = vector.shape_cast %51 : vector<1xf32> to vector<1x1xf32>
    %53 = vector.broadcast %52 : vector<1x1xf32> to vector<8x32xf32>
    %54 = arith.subf %34, %53 : vector<8x32xf32>
    %55 = math.exp %54 : vector<8x32xf32>
    %56 = vector.broadcast %52 : vector<1x1xf32> to vector<8x32xf32>
    %57 = arith.subf %45, %56 : vector<8x32xf32>
    %58 = math.exp %57 : vector<8x32xf32>
    %cst_39 = arith.constant dense<0.000000e+00> : vector<32xf32>
    %59 = vector.multi_reduction <add>, %55, %cst_39 [0] : vector<8x32xf32> to vector<32xf32>
    %60 = vector.shape_cast %59 : vector<32xf32> to vector<1x32xf32>
    %cst_40 = arith.constant dense<0.000000e+00> : vector<32xf32>
    %61 = vector.multi_reduction <add>, %58, %cst_40 [0] : vector<8x32xf32> to vector<32xf32>
    %62 = vector.shape_cast %61 : vector<32xf32> to vector<1x32xf32>
    %63 = arith.addf %60, %62 : vector<1x32xf32>
    %c0_41 = arith.constant 0 : index
    %c0_42 = arith.constant 0 : index
    %64 = vector.load %arg14[%c0_41, %c0_42] : memref<32x32xf32, #tpu.memory_space<vmem>>, vector<32x32xf32>
    %cst_43 = arith.constant dense<0.000000e+00> : vector<1x32xf32>
    %65 = tpu.matmul %63, %64, %cst_43 {dimension_numbers = #tpu.dot_dimension_numbers<[1], [0], [0], [1], [0, 0, 1, 1], [], []>} : vector<1x32xf32>, vector<32x32xf32>, vector<1x32xf32> -> vector<1x32xf32>
    %66 = tpu.reciprocal %65 : vector<1x32xf32> -> vector<1x32xf32>
    %67 = vector.extract_strided_slice %23 {offsets = [0, 0], sizes = [8, 32], strides = [1, 1]} : vector<16x32xf32> to vector<8x32xf32>
    %68 = arith.mulf %55, %67 : vector<8x32xf32>
    %69 = vector.extract_strided_slice %23 {offsets = [8, 0], sizes = [8, 32], strides = [1, 1]} : vector<16x32xf32> to vector<8x32xf32>
    %70 = arith.mulf %58, %69 : vector<8x32xf32>
    %71 = arith.addf %68, %70 : vector<8x32xf32>
    %72 = vector.broadcast %66 : vector<1x32xf32> to vector<8x32xf32>
    %73 = arith.mulf %71, %72 : vector<8x32xf32>
    %c0_44 = arith.constant 0 : index
    %c0_45 = arith.constant 0 : index
    %74 = vector.load %arg12[%c0_44, %c0_45] : memref<32x32xf32, #tpu.memory_space<vmem>>, vector<32x32xf32>
    %cst_46 = arith.constant dense<0.000000e+00> : vector<8x32xf32>
    %75 = tpu.matmul %73, %74, %cst_46 {dimension_numbers = #tpu.dot_dimension_numbers<[1], [0], [0], [1], [0, 0, 1, 1], [], []>} : vector<8x32xf32>, vector<32x32xf32>, vector<8x32xf32> -> vector<8x32xf32>
    %c0_47 = arith.constant 0 : index
    %c0_48 = arith.constant 0 : index
    %76 = vector.load %arg13[%c0_47, %c0_48] : memref<1x32xf32, #tpu.memory_space<vmem>>, vector<1x32xf32>
    %77 = vector.broadcast %76 : vector<1x32xf32> to vector<8x32xf32>
    %78 = arith.addf %75, %77 : vector<8x32xf32>
    %79 = arith.addf %10, %78 : vector<8x32xf32>
    %cst_49 = arith.constant dense<0.000000e+00> : vector<8xf32>
    %80 = vector.multi_reduction <add>, %79, %cst_49 [1] : vector<8x32xf32> to vector<8xf32>
    %81 = vector.shape_cast %80 : vector<8xf32> to vector<8x1xf32>
    %cst_50 = arith.constant 3.200000e+01 : f32
    %82 = vector.broadcast %cst_50 : f32 to vector<8x1xf32>
    %83 = arith.divf %81, %82 : vector<8x1xf32>
    %84 = vector.broadcast %83 : vector<8x1xf32> to vector<8x32xf32>
    %85 = arith.subf %79, %84 : vector<8x32xf32>
    %86 = arith.mulf %85, %85 : vector<8x32xf32>
    %cst_51 = arith.constant dense<0.000000e+00> : vector<8xf32>
    %87 = vector.multi_reduction <add>, %86, %cst_51 [1] : vector<8x32xf32> to vector<8xf32>
    %88 = vector.shape_cast %87 : vector<8xf32> to vector<8x1xf32>
    %cst_52 = arith.constant 3.200000e+01 : f32
    %89 = vector.broadcast %cst_52 : f32 to vector<8x1xf32>
    %90 = arith.divf %88, %89 : vector<8x1xf32>
    %91 = vector.broadcast %83 : vector<8x1xf32> to vector<8x32xf32>
    %92 = arith.subf %79, %91 : vector<8x32xf32>
    %cst_53 = arith.constant 9.99999974E-6 : f32
    %93 = vector.broadcast %cst_53 : f32 to vector<8x1xf32>
    %94 = arith.addf %90, %93 : vector<8x1xf32>
    %95 = math.rsqrt %94 : vector<8x1xf32>
    %96 = vector.broadcast %95 : vector<8x1xf32> to vector<8x32xf32>
    %97 = arith.mulf %92, %96 : vector<8x32xf32>
    %c0_54 = arith.constant 0 : index
    %c0_55 = arith.constant 0 : index
    %98 = vector.load %arg15[%c0_54, %c0_55] : memref<1x32xf32, #tpu.memory_space<vmem>>, vector<1x32xf32>
    %99 = vector.broadcast %98 : vector<1x32xf32> to vector<8x32xf32>
    %100 = arith.mulf %97, %99 : vector<8x32xf32>
    %c0_56 = arith.constant 0 : index
    %c0_57 = arith.constant 0 : index
    %101 = vector.load %arg16[%c0_56, %c0_57] : memref<1x32xf32, #tpu.memory_space<vmem>>, vector<1x32xf32>
    %102 = vector.broadcast %101 : vector<1x32xf32> to vector<8x32xf32>
    %103 = arith.addf %100, %102 : vector<8x32xf32>
    %c0_58 = arith.constant 0 : index
    %c0_59 = arith.constant 0 : index
    %104 = vector.load %arg17[%c0_58, %c0_59] : memref<8x32xf32, #tpu.memory_space<vmem>>, vector<8x32xf32>
    tpu.vector_store %arg17[%c0_58, %c0_59], %103 {strides = array<i32>} : memref<8x32xf32, #tpu.memory_space<vmem>>, vector<8x32xf32>,
    return
  }
  func.func @transform_0(%arg0: i32) -> (i32, i32) {
    %c0_i32 = arith.constant 0 : i32
    %c0_i32_0 = arith.constant 0 : i32
    %c0_i32_1 = arith.constant 0 : i32
    return %c0_i32, %c0_i32_0 : i32, i32
  }
  func.func @transform_1(%arg0: i32) -> (i32, i32) {
    %c0_i32 = arith.constant 0 : i32
    %c0_i32_0 = arith.constant 0 : i32
    %c0_i32_1 = arith.constant 0 : i32
    return %c0_i32, %c0_i32_0 : i32, i32
  }
  func.func @transform_2(%arg0: i32) -> (i32, i32) {
    %c0_i32 = arith.constant 0 : i32
    %c0_i32_0 = arith.constant 0 : i32
    %c0_i32_1 = arith.constant 0 : i32
    return %c0_i32, %c0_i32_0 : i32, i32
  }
  func.func @transform_3(%arg0: i32) -> (i32, i32) {
    %c0_i32 = arith.constant 0 : i32
    %c0_i32_0 = arith.constant 0 : i32
    %c0_i32_1 = arith.constant 0 : i32
    return %c0_i32, %c0_i32_0 : i32, i32
  }
  func.func @transform_4(%arg0: i32) -> (i32, i32) {
    %c0_i32 = arith.constant 0 : i32
    %c0_i32_0 = arith.constant 0 : i32
    %c0_i32_1 = arith.constant 0 : i32
    return %c0_i32, %c0_i32_0 : i32, i32
  }
  func.func @transform_5(%arg0: i32) -> (i32, i32, i32) {
    %c0_i32 = arith.constant 0 : i32
    %c0_i32_0 = arith.constant 0 : i32
    %c0_i32_1 = arith.constant 0 : i32
    %c0_i32_2 = arith.constant 0 : i32
    return %c0_i32, %c0_i32_0, %c0_i32_1 : i32, i32, i32
  }
  func.func @transform_6(%arg0: i32) -> (i32, i32, i32) {
    %c0_i32 = arith.constant 0 : i32
    %c0_i32_0 = arith.constant 0 : i32
    %c0_i32_1 = arith.constant 0 : i32
    %c0_i32_2 = arith.constant 0 : i32
    return %c0_i32, %c0_i32_0, %c0_i32_1 : i32, i32, i32
  }
  func.func @transform_7(%arg0: i32) -> (i32, i32) {
    %c0_i32 = arith.constant 0 : i32
    %c0_i32_0 = arith.constant 0 : i32
    %c0_i32_1 = arith.constant 0 : i32
    return %c0_i32, %c0_i32_0 : i32, i32
  }
  func.func @transform_8(%arg0: i32) -> (i32, i32) {
    %c0_i32 = arith.constant 0 : i32
    %c0_i32_0 = arith.constant 0 : i32
    %c0_i32_1 = arith.constant 0 : i32
    return %c0_i32, %c0_i32_0 : i32, i32
  }
  func.func @transform_9(%arg0: i32) -> (i32, i32) {
    %c0_i32 = arith.constant 0 : i32
    %c0_i32_0 = arith.constant 0 : i32
    %c0_i32_1 = arith.constant 0 : i32
    return %c0_i32, %c0_i32_0 : i32, i32
  }
  func.func @transform_10(%arg0: i32) -> (i32, i32) {
    %c0_i32 = arith.constant 0 : i32
    %c0_i32_0 = arith.constant 0 : i32
    %c0_i32_1 = arith.constant 0 : i32
    return %c0_i32, %c0_i32_0 : i32, i32
  }
  func.func @transform_11(%arg0: i32) -> (i32, i32) {
    %c0_i32 = arith.constant 0 : i32
    %c0_i32_0 = arith.constant 0 : i32
    %c0_i32_1 = arith.constant 0 : i32
    return %c0_i32, %c0_i32_0 : i32, i32
  }
  func.func @transform_12(%arg0: i32) -> (i32, i32) {
    %c0_i32 = arith.constant 0 : i32
    %c0_i32_0 = arith.constant 0 : i32
    %c0_i32_1 = arith.constant 0 : i32
    return %c0_i32, %c0_i32_0 : i32, i32
  }
  func.func @transform_13(%arg0: i32) -> (i32, i32) {
    %c0_i32 = arith.constant 0 : i32
    %c0_i32_0 = arith.constant 0 : i32
    %c0_i32_1 = arith.constant 0 : i32
    return %c0_i32, %c0_i32_0 : i32, i32
  }
  func.func @transform_14(%arg0: i32) -> (i32, i32) {
    %c0_i32 = arith.constant 0 : i32
    %c0_i32_0 = arith.constant 0 : i32
    %c0_i32_1 = arith.constant 0 : i32
    return %c0_i32, %c0_i32_0 : i32, i32
  }
  func.func @transform_15(%arg0: i32) -> (i32, i32) {
    %c0_i32 = arith.constant 0 : i32
    %c0_i32_0 = arith.constant 0 : i32
    %c0_i32_1 = arith.constant 0 : i32
    return %c0_i32, %c0_i32_0 : i32, i32
  }
  func.func @transform_16(%arg0: i32) -> (i32, i32) {
    %c0_i32 = arith.constant 0 : i32
    %c0_i32_0 = arith.constant 0 : i32
    %c0_i32_1 = arith.constant 0 : i32
    return %c0_i32, %c0_i32_0 : i32, i32
  }
}

</mosaic_0001>

<llo_original>
// kernel: multi_head_attention.1
$region0: #{multi_head_attention.1}
  #allocation0 [shape = 'u32[]', space=smem, size = 0x4, offset = 0x4, fixed_abs, tag = 'smem constant byte address 0x4 - core index']
  #allocation1 [shape = 'u32[72,128]{1,0:T(1,128)}', space=vmem, size = 0x9000, scoped, tag = 'internal scratch']
  %s0 = inlined_call_operand.vmem [shape: f32[16,32], index: 0, kind: input, shape index: {}]
  %s1 = inlined_call_operand.vmem [shape: f32[16,32], index: 1, kind: input, shape index: {}]
  %s2 = inlined_call_operand.vmem [shape: f32[16,16], index: 2, kind: input, shape index: {}]
  %s3 = inlined_call_operand.vmem [shape: f32[32,32], index: 3, kind: input, shape index: {}]
  %s4 = inlined_call_operand.vmem [shape: f32[1,32], index: 4, kind: input, shape index: {}]
  %s5 = inlined_call_operand.vmem [shape: f32[2,32,32], index: 5, kind: input, shape index: {}]
  %s6 = inlined_call_operand.vmem [shape: f32[2,1,32], index: 6, kind: input, shape index: {}]
  %s7 = inlined_call_operand.vmem [shape: f32[32,32], index: 7, kind: input, shape index: {}]
  %s8 = inlined_call_operand.vmem [shape: f32[1,32], index: 8, kind: input, shape index: {}]
  %s9 = inlined_call_operand.vmem [shape: f32[32,32], index: 9, kind: input, shape index: {}]
  %s10 = inlined_call_operand.vmem [shape: f32[1,32], index: 10, kind: input, shape index: {}]
  %s11 = inlined_call_operand.vmem [shape: f32[32,32], index: 11, kind: input, shape index: {}]
  %s12 = inlined_call_operand.vmem [shape: f32[1,32], index: 12, kind: input, shape index: {}]
  %s13 = inlined_call_operand.vmem [shape: f32[32,32], index: 13, kind: input, shape index: {}]
  %s14 = inlined_call_operand.vmem [shape: f32[1,32], index: 14, kind: input, shape index: {}]
  %s15 = inlined_call_operand.vmem [shape: f32[1,32], index: 15, kind: input, shape index: {}]
  %s16 = inlined_call_operand.hbm [shape: f32[8,32], index: 16, kind: output, shape index: {}]
  %s17 = sld [smem:[#allocation0]]
  $region74: #{multi_head_attention.1} parent=0
    _
  %s19 = ssub.s32 1, %s17
  %s20 = scalar_select 0, %s19, %s17
  $region1: #{multi_head_attention.1} parent=0
    #allocation2 [shape = 'u8[4096]{0}', space=vmem, size = 0x1000, scoped, tag = 'output window, operand 0, single buffered']
    #allocation3 [shape = 's32[1]{0}', space=sflag, size = 0x4, scoped, tag = 'scoped memory for multi_head_attention.1']
    %21 = vsyncpa [#allocation3], 0
    // Predicated region
    $region2: #{multi_head_attention.1} parent=1 // pred_check
      _
    $region3: #{multi_head_attention.1} parent=1 // pred_check_branch
      %23 = sbr.rel (0) target = $region5
    $region4: #{multi_head_attention.1} parent=1 // pred_region
      _
    $region5: #{multi_head_attention.1} parent=1 // pred_fallthru
      _
    // Predicated region
    $region6: #{multi_head_attention.1} parent=1 // pred_check
      _
    $region7: #{multi_head_attention.1} parent=1 // pred_check_branch
      %25 = sbr.rel (0) target = $region9
    $region8: #{multi_head_attention.1} parent=1 // pred_region
      _
    $region9: #{multi_head_attention.1} parent=1 // pred_fallthru
      _
    // Predicated region
    $region10: #{multi_head_attention.1} parent=1 // pred_check
      _
    $region11: #{multi_head_attention.1} parent=1 // pred_check_branch
      %27 = sbr.rel (0) target = $region13
    $region12: #{multi_head_attention.1} parent=1 // pred_region
      _
    $region13: #{multi_head_attention.1} parent=1 // pred_fallthru
      _
    // Predicated region
    $region14: #{multi_head_attention.1} parent=1 // pred_check
      _
    $region15: #{multi_head_attention.1} parent=1 // pred_check_branch
      %29 = sbr.rel (0) target = $region17
    $region16: #{multi_head_attention.1} parent=1 // pred_region
      _
    $region17: #{multi_head_attention.1} parent=1 // pred_fallthru
      _
    // Predicated region
    $region18: #{multi_head_attention.1} parent=1 // pred_check
      _
    $region19: #{multi_head_attention.1} parent=1 // pred_check_branch
      %31 = sbr.rel (0) target = $region21
    $region20: #{multi_head_attention.1} parent=1 // pred_region
      _
    $region21: #{multi_head_attention.1} parent=1 // pred_fallthru
      _
    // Predicated region
    $region22: #{multi_head_attention.1} parent=1 // pred_check
      _
    $region23: #{multi_head_attention.1} parent=1 // pred_check_branch
      %33 = sbr.rel (0) target = $region25
    $region24: #{multi_head_attention.1} parent=1 // pred_region
      _
    $region25: #{multi_head_attention.1} parent=1 // pred_fallthru
      _
    // Predicated region
    $region26: #{multi_head_attention.1} parent=1 // pred_check
      _
    $region27: #{multi_head_attention.1} parent=1 // pred_check_branch
      %35 = sbr.rel (0) target = $region29
    $region28: #{multi_head_attention.1} parent=1 // pred_region
      _
    $region29: #{multi_head_attention.1} parent=1 // pred_fallthru
      _
    // Predicated region
    $region30: #{multi_head_attention.1} parent=1 // pred_check
      _
    $region31: #{multi_head_attention.1} parent=1 // pred_check_branch
      %37 = sbr.rel (0) target = $region33
    $region32: #{multi_head_attention.1} parent=1 // pred_region
      _
    $region33: #{multi_head_attention.1} parent=1 // pred_fallthru
      _
    // Predicated region
    $region34: #{multi_head_attention.1} parent=1 // pred_check
      _
    $region35: #{multi_head_attention.1} parent=1 // pred_check_branch
      %39 = sbr.rel (0) target = $region37
    $region36: #{multi_head_attention.1} parent=1 // pred_region
      _
    $region37: #{multi_head_attention.1} parent=1 // pred_fallthru
      _
    // Predicated region
    $region38: #{multi_head_attention.1} parent=1 // pred_check
      _
    $region39: #{multi_head_attention.1} parent=1 // pred_check_branch
      %41 = sbr.rel (0) target = $region41
    $region40: #{multi_head_attention.1} parent=1 // pred_region
      _
    $region41: #{multi_head_attention.1} parent=1 // pred_fallthru
      _
    // Predicated region
    $region42: #{multi_head_attention.1} parent=1 // pred_check
      _
    $region43: #{multi_head_attention.1} parent=1 // pred_check_branch
      %43 = sbr.rel (0) target = $region45
    $region44: #{multi_head_attention.1} parent=1 // pred_region
      _
    $region45: #{multi_head_attention.1} parent=1 // pred_fallthru
      _
    // Predicated region
    $region46: #{multi_head_attention.1} parent=1 // pred_check
      _
    $region47: #{multi_head_attention.1} parent=1 // pred_check_branch
      %45 = sbr.rel (0) target = $region49
    $region48: #{multi_head_attention.1} parent=1 // pred_region
      _
    $region49: #{multi_head_attention.1} parent=1 // pred_fallthru
      _
    // Predicated region
    $region50: #{multi_head_attention.1} parent=1 // pred_check
      _
    $region51: #{multi_head_attention.1} parent=1 // pred_check_branch
      %47 = sbr.rel (0) target = $region53
    $region52: #{multi_head_attention.1} parent=1 // pred_region
      _
    $region53: #{multi_head_attention.1} parent=1 // pred_fallthru
      _
    // Predicated region
    $region54: #{multi_head_attention.1} parent=1 // pred_check
      _
    $region55: #{multi_head_attention.1} parent=1 // pred_check_branch
      %49 = sbr.rel (0) target = $region57
    $region56: #{multi_head_attention.1} parent=1 // pred_region
      _
    $region57: #{multi_head_attention.1} parent=1 // pred_fallthru
      _
    // Predicated region
    $region58: #{multi_head_attention.1} parent=1 // pred_check
      _
    $region59: #{multi_head_attention.1} parent=1 // pred_check_branch
      %51 = sbr.rel (0) target = $region61
    $region60: #{multi_head_attention.1} parent=1 // pred_region
      _
    $region61: #{multi_head_attention.1} parent=1 // pred_fallthru
      _
    // Predicated region
    $region62: #{multi_head_attention.1} parent=1 // pred_check
      _
    $region63: #{multi_head_attention.1} parent=1 // pred_check_branch
      %53 = sbr.rel (0) target = $region65
    $region64: #{multi_head_attention.1} parent=1 // pred_region
      _
    $region65: #{multi_head_attention.1} parent=1 // pred_fallthru
      _
    %v54 = vld [vmem:[%s0] sm:$0xff]
    %v55 = vld [vmem:[%s0 + $0x8] sm:$0xff]
    %v56 = vadd.f32 %v54, %v55
    %v57 = vmul.f32 %v56, 0.5
    %v58 = vld [vmem:[%s3] sm:$0xff]
    %v59 = vld [vmem:[%s3 + $0x8] sm:$0xff]
    %v60 = vld [vmem:[%s3 + $0x10] sm:$0xff]
    %v61 = vld [vmem:[%s3 + $0x18] sm:$0xff]
    %v62 = vld [vmem:[%s4] sm:$0x1]
    %v64 = vperm.slane %v62, 0
    %vm66 = vcmask 261120
    %v68 = vsel %vm66, %v57, 0
    %70 = vmatpush.msra.mxu0 0.0
    %71 = vmatpush.msra.mxu0 0.0
    %72 = vmatpush.msra.mxu0 0.0
    %73 = vmatpush.msra.mxu0 0.0
    %74 = vmatpush.msra.mxu0 0.0
    %75 = vmatpush.msra.mxu0 0.0
    %76 = vmatpush.msra.mxu0 0.0
    %77 = vmatpush.msra.mxu0 0.0
    %78 = vmatpush.msra.mxu0 0.0
    %79 = vmatpush.msra.mxu0 0.0
    %80 = vmatpush.msra.mxu0 0.0
    %81 = vmatpush.msra.mxu0 0.0
    %82 = vmatpush.msra.mxu0 %v61
    %83 = vmatpush.msra.mxu0 %v60
    %84 = vmatpush.msra.mxu0 %v59
    %85 = vmatpush.msra.mxu0 %v58
    %86 = vmatmul.f32.gmra.mxu0 %v68
    %v87 = vpop.f32.mrf.mxu0
    %v88 = vadd.f32 %v64, %v87
    %89 = vdwg.mxu0
    %v90 = vld [vmem:[%s1] sm:$0xff]
    %v91 = vld [vmem:[%s1 + $0x8] sm:$0xff]
    %v92 = vld [vmem:[%s7] sm:$0xff]
    %v93 = vld [vmem:[%s7 + $0x8] sm:$0xff]
    %v94 = vld [vmem:[%s7 + $0x10] sm:$0xff]
    %v95 = vld [vmem:[%s7 + $0x18] sm:$0xff]
    %v96 = vld [vmem:[%s8] sm:$0x1]
    %v98 = vperm.slane %v96, 0
    %v101 = vsel %vm66, %v90, 0
    %v104 = vsel %vm66, %v91, 0
    %106 = vmatpush.msra.mxu0 0.0
    %107 = vmatpush.msra.mxu0 0.0
    %108 = vmatpush.msra.mxu0 0.0
    %109 = vmatpush.msra.mxu0 0.0
    %110 = vmatpush.msra.mxu0 0.0
    %111 = vmatpush.msra.mxu0 0.0
    %112 = vmatpush.msra.mxu0 0.0
    %113 = vmatpush.msra.mxu0 0.0
    %114 = vmatpush.msra.mxu0 0.0
    %115 = vmatpush.msra.mxu0 0.0
    %116 = vmatpush.msra.mxu0 0.0
    %117 = vmatpush.msra.mxu0 0.0
    %118 = vmatpush.msra.mxu0 %v95
    %119 = vmatpush.msra.mxu0 %v94
    %120 = vmatpush.msra.mxu0 %v93
    %121 = vmatpush.msra.mxu0 %v92
    %122 = vmatmul.f32.gmra.mxu0 %v101
    %v123 = vpop.f32.mrf.mxu0
    %v124 = vadd.f32 %v98, %v123
    %125 = vmatmul.f32.gmra.mxu0 %v104
    %v126 = vpop.f32.mrf.mxu0
    %v127 = vadd.f32 %v98, %v126
    %128 = vdwg.mxu0
    %v129 = vld [vmem:[%s2] sm:$0xff]
    %v130 = vld [vmem:[%s2 + $0x8] sm:$0xff]
    %vm131 = vcmask 130048
    %v133 = vsel %vm131, %v129, 0
    %v136 = vsel %vm131, %v130, 0
    %138 = vmatpush.msra.mxu0 0.0
    %139 = vmatpush.msra.mxu0 0.0
    %140 = vmatpush.msra.mxu0 0.0
    %141 = vmatpush.msra.mxu0 0.0
    %142 = vmatpush.msra.mxu0 0.0
    %143 = vmatpush.msra.mxu0 0.0
    %144 = vmatpush.msra.mxu0 0.0
    %145 = vmatpush.msra.mxu0 0.0
    %146 = vmatpush.msra.mxu0 0.0
    %147 = vmatpush.msra.mxu0 0.0
    %148 = vmatpush.msra.mxu0 0.0
    %149 = vmatpush.msra.mxu0 0.0
    %150 = vmatpush.msra.mxu0 0.0
    %151 = vmatpush.msra.mxu0 0.0
    %152 = vmatpush.msra.mxu0 %v55
    %153 = vmatpush.msra.mxu0 %v54
    %154 = vmatmul.f32.gmra.mxu0 %v133
    %v155 = vpop.f32.mrf.mxu0
    %v156 = vadd.f32 0.0, %v155
    %157 = vmatmul.f32.gmra.mxu0 %v136
    %v158 = vpop.f32.mrf.mxu0
    %v159 = vadd.f32 0.0, %v158
    %160 = vdwg.mxu0
    %v161 = vld [vmem:[%s9] sm:$0xff]
    %v162 = vld [vmem:[%s9 + $0x8] sm:$0xff]
    %v163 = vld [vmem:[%s9 + $0x10] sm:$0xff]
    %v164 = vld [vmem:[%s9 + $0x18] sm:$0xff]
    %v165 = vld [vmem:[%s10] sm:$0x1]
    %v167 = vperm.slane %v165, 0
    %v170 = vsel %vm66, %v156, 0
    %v173 = vsel %vm66, %v159, 0
    %175 = vmatpush.msra.mxu0 0.0
    %176 = vmatpush.msra.mxu0 0.0
    %177 = vmatpush.msra.mxu0 0.0
    %178 = vmatpush.msra.mxu0 0.0
    %179 = vmatpush.msra.mxu0 0.0
    %180 = vmatpush.msra.mxu0 0.0
    %181 = vmatpush.msra.mxu0 0.0
    %182 = vmatpush.msra.mxu0 0.0
    %183 = vmatpush.msra.mxu0 0.0
    %184 = vmatpush.msra.mxu0 0.0
    %185 = vmatpush.msra.mxu0 0.0
    %186 = vmatpush.msra.mxu0 0.0
    %187 = vmatpush.msra.mxu0 %v164
    %188 = vmatpush.msra.mxu0 %v163
    %189 = vmatpush.msra.mxu0 %v162
    %190 = vmatpush.msra.mxu0 %v161
    %191 = vmatmul.f32.gmra.mxu0 %v170
    %v192 = vpop.f32.mrf.mxu0
    %v193 = vadd.f32 %v167, %v192
    %194 = vmatmul.f32.gmra.mxu0 %v173
    %v195 = vpop.f32.mrf.mxu0
    %v196 = vadd.f32 %v167, %v195
    %197 = vdwg.mxu0
    %v198 = vld [vmem:[%s5] sm:$0xff]
    %v199 = vld [vmem:[%s5 + $0x8] sm:$0xff]
    %v200 = vld [vmem:[%s5 + $0x10] sm:$0xff]
    %v201 = vld [vmem:[%s5 + $0x18] sm:$0xff]
    %v202 = vld [vmem:[%s6] sm:$0x1]
    %v204 = vperm.slane %v202, 0
    %206 = vmatpush.msra.mxu0 0.0
    %207 = vmatpush.msra.mxu0 0.0
    %208 = vmatpush.msra.mxu0 0.0
    %209 = vmatpush.msra.mxu0 0.0
    %210 = vmatpush.msra.mxu0 0.0
    %211 = vmatpush.msra.mxu0 0.0
    %212 = vmatpush.msra.mxu0 0.0
    %213 = vmatpush.msra.mxu0 0.0
    %214 = vmatpush.msra.mxu0 0.0
    %215 = vmatpush.msra.mxu0 0.0
    %216 = vmatpush.msra.mxu0 0.0
    %217 = vmatpush.msra.mxu0 0.0
    %218 = vmatpush.msra.mxu0 %v201
    %219 = vmatpush.msra.mxu0 %v200
    %220 = vmatpush.msra.mxu0 %v199
    %221 = vmatpush.msra.mxu0 %v198
    %222 = vmatmul.f32.gmra.mxu0 %v68
    %v223 = vpop.f32.mrf.mxu0
    %v224 = vadd.f32 %v204, %v223
    %225 = vdwg.mxu0
    %v226 = vmul.f32 %v224, %v124
    %v227 = vmul.f32 %v226, 0.5
    %s228 = scalar_lea.vmem %s5, 32
    %v229 = vld [vmem:[%s228] sm:$0xff]
    %v230 = vld [vmem:[%s228 + $0x8] sm:$0xff]
    %v231 = vld [vmem:[%s228 + $0x10] sm:$0xff]
    %v232 = vld [vmem:[%s228 + $0x18] sm:$0xff]
    %s233 = scalar_lea.vmem %s6, 1
    %v234 = vld [vmem:[%s233] sm:$0x1]
    %v236 = vperm.slane %v234, 0
    %238 = vmatpush.msra.mxu0 0.0
    %239 = vmatpush.msra.mxu0 0.0
    %240 = vmatpush.msra.mxu0 0.0
    %241 = vmatpush.msra.mxu0 0.0
    %242 = vmatpush.msra.mxu0 0.0
    %243 = vmatpush.msra.mxu0 0.0
    %244 = vmatpush.msra.mxu0 0.0
    %245 = vmatpush.msra.mxu0 0.0
    %246 = vmatpush.msra.mxu0 0.0
    %247 = vmatpush.msra.mxu0 0.0
    %248 = vmatpush.msra.mxu0 0.0
    %249 = vmatpush.msra.mxu0 0.0
    %250 = vmatpush.msra.mxu0 %v232
    %251 = vmatpush.msra.mxu0 %v231
    %252 = vmatpush.msra.mxu0 %v230
    %253 = vmatpush.msra.mxu0 %v229
    %254 = vmatmul.f32.gmra.mxu0 %v68
    %v255 = vpop.f32.mrf.mxu0
    %v256 = vadd.f32 %v236, %v255
    %257 = vdwg.mxu0
    %v258 = vmul.f32 %v256, %v127
    %v259 = vmul.f32 %v258, 0.5
    %v260 = vsel %vm66, %v227, -inf
    %v261 = vrot.slane %v260, 4
    %v262 = vmax.f32 %v260, %v261
    %v263 = vrot.slane %v262, 2
    %v264 = vmax.f32 %v262, %v263
    %v265 = vrot.slane %v264, 1
    %v266 = vmax.f32 %v264, %v265
    %v267 = vsel %vm66, %v259, -inf
    %v268 = vrot.slane %v267, 4
    %v269 = vmax.f32 %v267, %v268
    %v270 = vrot.slane %v269, 2
    %v271 = vmax.f32 %v269, %v270
    %v272 = vrot.slane %v271, 1
    %v273 = vmax.f32 %v271, %v272
    %v274 = vmax.f32 %v266, %v273
    %v275 = vsel %vm66, %v274, -inf
    %276 = vmax.xlane.f32.xlu0 %v275
    %v277 = vpop.xlane.xlu0 %276
    %v278 = vsub.f32 %v227, %v277
    %v279 = vmul.f32 %v278, 1.442695
    %v280 = vpow.pop %v279
    %v281 = vsub.f32 %v259, %v277
    %v282 = vmul.f32 %v281, 1.442695
    %v283 = vpow.pop %v282
    %v284 = vsel %vm66, %v280, 0.0
    %v285 = vrot.slane %v284, 4
    %v286 = vadd.f32 %v284, %v285
    %v287 = vrot.slane %v286, 2
    %v288 = vadd.f32 %v286, %v287
    %v289 = vrot.slane %v288, 1
    %v290 = vadd.f32 %v288, %v289
    %v291 = vsel %vm66, %v283, 0.0
    %v292 = vrot.slane %v291, 4
    %v293 = vadd.f32 %v291, %v292
    %v294 = vrot.slane %v293, 2
    %v295 = vadd.f32 %v293, %v294
    %v296 = vrot.slane %v295, 1
    %v297 = vadd.f32 %v295, %v296
    %v298 = vadd.f32 %v290, %v297
    %v299 = vld [vmem:[%s13] sm:$0xff]
    %v300 = vld [vmem:[%s13 + $0x8] sm:$0xff]
    %v301 = vld [vmem:[%s13 + $0x10] sm:$0xff]
    %v302 = vld [vmem:[%s13 + $0x18] sm:$0xff]
    %v304 = vsel %vm66, %v298, 0
    %306 = vmatpush.msra.mxu0 0.0
    %307 = vmatpush.msra.mxu0 0.0
    %308 = vmatpush.msra.mxu0 0.0
    %309 = vmatpush.msra.mxu0 0.0
    %310 = vmatpush.msra.mxu0 0.0
    %311 = vmatpush.msra.mxu0 0.0
    %312 = vmatpush.msra.mxu0 0.0
    %313 = vmatpush.msra.mxu0 0.0
    %314 = vmatpush.msra.mxu0 0.0
    %315 = vmatpush.msra.mxu0 0.0
    %316 = vmatpush.msra.mxu0 0.0
    %317 = vmatpush.msra.mxu0 0.0
    %318 = vmatpush.msra.mxu0 %v302
    %319 = vmatpush.msra.mxu0 %v301
    %320 = vmatpush.msra.mxu0 %v300
    %321 = vmatpush.msra.mxu0 %v299
    %322 = vmatmul.f32.gmra.mxu0 %v304
    %v323 = vpop.f32.mrf.mxu0
    %v324 = vadd.f32 0.0, %v323
    %325 = vdwg.mxu0
    %v326 = vrcp.pop %v324
    %v327 = vmul.f32 %v324, %v326
    %v328 = vsub.f32 1.0, %v327
    %v329 = vmul.f32 %v326, %v328
    %v330 = vadd.f32 %v326, %v329
    %vm331 = vweird.f32 %v324
    %vm332 = vweird.f32 %v326
    %vm333 = vmor %vm331, %vm332
    %v334 = vsel %vm333, %v326, %v330
    %v335 = vand.u32 2147483647, %v324
    %vm336 = vcmp.eq.f32.partialorder %v335, 8.507059e+37
    %v337 = vand.u32 %v324, 2147483648
    %v338 = vor.u32 1.1754944e-38, %v337
    %v339 = vsel %vm336, %v338, %v334
    %v340 = vmul.f32 %v280, %v193
    %v341 = vmul.f32 %v283, %v196
    %v342 = vadd.f32 %v340, %v341
    %v343 = vperm.slane %v339, 0
    %v344 = vmul.f32 %v342, %v343
    %v345 = vld [vmem:[%s11] sm:$0xff]
    %v346 = vld [vmem:[%s11 + $0x8] sm:$0xff]
    %v347 = vld [vmem:[%s11 + $0x10] sm:$0xff]
    %v348 = vld [vmem:[%s11 + $0x18] sm:$0xff]
    %v349 = vld [vmem:[%s12] sm:$0x1]
    %v351 = vperm.slane %v349, 0
    %v354 = vsel %vm66, %v344, 0
    %356 = vmatpush.msra.mxu0 0.0
    %357 = vmatpush.msra.mxu0 0.0
    %358 = vmatpush.msra.mxu0 0.0
    %359 = vmatpush.msra.mxu0 0.0
    %360 = vmatpush.msra.mxu0 0.0
    %361 = vmatpush.msra.mxu0 0.0
    %362 = vmatpush.msra.mxu0 0.0
    %363 = vmatpush.msra.mxu0 0.0
    %364 = vmatpush.msra.mxu0 0.0
    %365 = vmatpush.msra.mxu0 0.0
    %366 = vmatpush.msra.mxu0 0.0
    %367 = vmatpush.msra.mxu0 0.0
    %368 = vmatpush.msra.mxu0 %v348
    %369 = vmatpush.msra.mxu0 %v347
    %370 = vmatpush.msra.mxu0 %v346
    %371 = vmatpush.msra.mxu0 %v345
    %372 = vmatmul.f32.gmra.mxu0 %v354
    %v373 = vpop.f32.mrf.mxu0
    %v374 = vadd.f32 %v351, %v373
    %375 = vdwg.mxu0
    %v376 = vadd.f32 %v88, %v374
    %v377 = vsel %vm66, %v376, 0.0
    %378 = vadd.xlane.f32.xlu0 %v377
    %v379 = vpop.xlane.xlu0 %378
    %v380 = vrcp.pop 32.0
    %v381 = vmul.f32 32.0, %v380
    %v382 = vsub.f32 1.0, %v381
    %v383 = vmul.f32 %v380, %v382
    %v384 = vadd.f32 %v380, %v383
    %vm385 = vweird.f32 %v380
    %v386 = vsel %vm385, %v380, %v384
    %v387 = vmul.f32 %v379, %v386
    %v388 = vsub.f32 %v376, %v387
    %v389 = vmul.f32 %v388, %v388
    %v390 = vsel %vm66, %v389, 0.0
    %391 = vadd.xlane.f32.xlu0 %v390
    %v392 = vpop.xlane.xlu0 %391
    %v393 = vmul.f32 %v392, %v386
    %v394 = vadd.f32 %v393, 1e-05
    %v395 = vrsqrt.pop %v394
    %v396 = vmul.f32 %v395, %v394
    %v397 = vmul.f32 %v396, %v395
    %v398 = vmul.f32 0.5, %v397
    %v399 = vsub.f32 1.5, %v398
    %v400 = vmul.f32 %v395, %v399
    %vm401 = vweird.f32 %v394
    %vm402 = vweird.f32 %v395
    %vm403 = vmor %vm401, %vm402
    %v404 = vsel %vm403, %v395, %v400
    %v405 = vmul.f32 %v388, %v404
    %v406 = vld [vmem:[%s14] sm:$0x1]
    %v408 = vperm.slane %v406, 0
    %v410 = vmul.f32 %v405, %v408
    %v411 = vld [vmem:[%s15] sm:$0x1]
    %v413 = vperm.slane %v411, 0
    %v415 = vadd.f32 %v410, %v413
    %416 = vst.msk [vmem:[#allocation2] sm:$0xff] %vm66, %v415
    // Predicated region
    $region66: #{multi_head_attention.1} parent=1 // pred_check
      _
    $region67: #{multi_head_attention.1} parent=1 // pred_check_branch
      %418 = sbr.rel (0) target = $region69
    $region68: #{multi_head_attention.1} parent=1 // pred_region
      %420 = vsyncadd [#allocation3], 0
      %s422 = sshll.u32 [#allocation2], 4
      %s423 = int_to_ptr.vmem [resolvable:$true] %s422
      %s424 = sshll.u32 %s16, 4
      %s425 = int_to_ptr.hbm [resolvable:$true] %s424
      %427 = dma.vmem_to_hbm [thread:$0]  %s423, 128, %s425, [#allocation3]
    $region69: #{multi_head_attention.1} parent=1 // pred_fallthru
      _
    // Predicated region
    $region70: #{multi_head_attention.1} parent=1 // pred_check
      _
    $region71: #{multi_head_attention.1} parent=1 // pred_check_branch
      %429 = sbr.rel (0) target = $region73
    $region72: #{multi_head_attention.1} parent=1 // pred_region
      %431 = dma.done [#allocation3], 128
    $region73: #{multi_head_attention.1} parent=1 // pred_fallthru
      _
    %432 = vsyncpa [#allocation3], 1

</llo_original>
